<compile_context>
chip_gen: v7x
topology: tpu7x:2x2x1
jax: 0.10.0
libtpu: 0.0.40
codegen_flags: <defaults>
</compile_context>

<pallas_src>
import functools

import jax
import jax.numpy as jnp
from jax import lax
from jax.experimental import pallas as pl
from jax.experimental.pallas import tpu as pltpu

M_MARGIN = 0.4
S_SCALE = 64.0
NORM_EPS = 1e-5        # F.normalize(eps=1e-05): x / max(||x||_2, eps)
NEG_BIG = -1e30        # "minus infinity" that stays NaN-free under f32 math


def _nsl_kernel(x_ref, w_ref, sw_ref, label_ref, loss_ref,
                xn_ref, m_ref, l_ref, t_ref,
                *, tc, num_classes, c_padded):
    c = pl.program_id(1)
    nc = pl.num_programs(1)

    # ---- once per batch tile: normalize x (f32), cast to compute dtype ------
    @pl.when(c == 0)
    def _init():
        x = x_ref[...].astype(jnp.float32)
        ss = jnp.sum(x * x, axis=-1, keepdims=True)                   # (TB, 1)
        xn = x * lax.rsqrt(jnp.maximum(ss, NORM_EPS * NORM_EPS))      # EUP rsqrt
        xn_ref[...] = xn.astype(xn_ref.dtype)
        m_ref[...] = jnp.full_like(m_ref, NEG_BIG)
        l_ref[...] = jnp.zeros_like(l_ref)
        t_ref[...] = jnp.zeros_like(t_ref)

    # ---- per class tile: cos = x_n @ W_tile.T on the MXU (f32 accumulation) -
    cos = lax.dot_general(xn_ref[...], w_ref[...],
                          dimension_numbers=(((1,), (1,)), ((), ())),
                          preferred_element_type=jnp.float32)          # (TB, TC)

    labels = label_ref[...]                                            # (TB, 1)
    cols = lax.broadcasted_iota(jnp.int32, cos.shape, 1) + c * tc      # (TB, TC)
    one_hot = cols == labels                                           # (TB, TC)

    # scale + per-column weight-norm folded into one (1, TC) vector (sw_ref),
    # margin folded into the constant -> single (TB, TC) multiply + subtract.
    logits = cos * sw_ref[...] - jnp.where(one_hot, S_SCALE * M_MARGIN, 0.0)
    if c_padded != num_classes:      # static: trace the mask only when padded
        logits = jnp.where(cols < num_classes, logits, NEG_BIG)

    # ---- online softmax accumulation ----------------------------------------
    m_prev = m_ref[...]
    m_new = jnp.maximum(m_prev, jnp.max(logits, axis=-1, keepdims=True))
    alpha = jnp.exp(m_prev - m_new)
    l_ref[...] = alpha * l_ref[...] + jnp.sum(jnp.exp(logits - m_new),
                                              axis=-1, keepdims=True)
    t_ref[...] = t_ref[...] + jnp.sum(jnp.where(one_hot, logits, 0.0),
                                      axis=-1, keepdims=True)
    m_ref[...] = m_new

    # ---- finalize: per-row cross entropy ------------------------------------
    @pl.when(c == nc - 1)
    def _finalize():
        loss_ref[...] = m_ref[...] + jnp.log(l_ref[...]) - t_ref[...]


def _round_up(a, b):
    return (a + b - 1) // b * b


def normalized_softmax_loss(x, weight, label, *, tb=256, tc=2048, use_bf16=True,
                            vmem_limit_bytes=48 * 1024 * 1024):
    """x: (B, D), weight: (C, D), label: (B,) int -> scalar f32 mean loss."""
    B, D = x.shape
    C, D_w = weight.shape
    assert D == D_w, (x.shape, weight.shape)

    # Hoisted per-class norm (computed once per call in f32, plain XLA),
    # pre-multiplied by the softmax scale s.
    w_f32 = weight.astype(jnp.float32)
    inv_wn = lax.rsqrt(jnp.maximum(jnp.sum(w_f32 * w_f32, axis=-1),
                                   NORM_EPS * NORM_EPS))               # (C,)
    scale_vec = S_SCALE * inv_wn

    compute_dtype = jnp.bfloat16 if use_bf16 else jnp.float32
    w_stream = weight.astype(compute_dtype)

    # ---- tile sizes ----------------------------------------------------------
    TB = min(tb, _round_up(B, 8))
    TC = min(tc, _round_up(C, 8))
    B_pad = _round_up(B, TB)
    # Keep at least 2 batch tiles when the batch allows it (both v7x TCs busy).
    if B_pad // TB < 2 and B_pad >= 16:
        TB = max(8, _round_up(B_pad // 2, 8))
        B_pad = _round_up(B, TB)
    C_pad = _round_up(C, TC)

    if B_pad != B:
        x = jnp.pad(x, ((0, B_pad - B), (0, 0)))
    if C_pad != C:
        w_stream = jnp.pad(w_stream, ((0, C_pad - C), (0, 0)))
        scale_vec = jnp.pad(scale_vec, (0, C_pad - C))
    scale_vec = scale_vec.reshape(1, C_pad)
    label2d = jnp.pad(label.astype(jnp.int32), (0, B_pad - B)).reshape(B_pad, 1)

    kernel = functools.partial(_nsl_kernel, tc=TC, num_classes=C, c_padded=C_pad)
    grid = (B_pad // TB, C_pad // TC)

    per_row = pl.pallas_call(
        kernel,
        out_shape=jax.ShapeDtypeStruct((B_pad, 1), jnp.float32),
        grid_spec=pltpu.PrefetchScalarGridSpec(
            num_scalar_prefetch=0,
            grid=grid,
            in_specs=[
                pl.BlockSpec((TB, D), lambda b, c: (b, 0)),   # x (C-invariant)
                pl.BlockSpec((TC, D), lambda b, c: (c, 0)),   # weight stream (bf16)
                pl.BlockSpec((1, TC), lambda b, c: (0, c)),   # s / ||w_c||  (f32)
                pl.BlockSpec((TB, 1), lambda b, c: (b, 0)),   # labels
            ],
            out_specs=pl.BlockSpec((TB, 1), lambda b, c: (b, 0)),
            scratch_shapes=[
                pltpu.VMEM((TB, D), compute_dtype),  # normalized x tile
                pltpu.VMEM((TB, 1), jnp.float32),    # running max  m
                pltpu.VMEM((TB, 1), jnp.float32),    # running sum  l
                pltpu.VMEM((TB, 1), jnp.float32),    # running target logit t
            ],
        ),
        compiler_params=pltpu.CompilerParams(
            dimension_semantics=("parallel", "arbitrary"),
            vmem_limit_bytes=vmem_limit_bytes,
        ),
    )(x, w_stream, scale_vec, label2d)

    return jnp.mean(per_row[:B, 0])


def _reference(x, weight, label):
    x = x.astype(jnp.float32)
    w = weight.astype(jnp.float32)
    x_n = x / jnp.maximum(jnp.linalg.norm(x, axis=-1, keepdims=True), NORM_EPS)
    w_n = w / jnp.maximum(jnp.linalg.norm(w, axis=-1, keepdims=True), NORM_EPS)
    cos = x_n @ w_n.T
    one_hot = jax.nn.one_hot(label, w.shape[0], dtype=jnp.float32)
    logits = S_SCALE * (cos - one_hot * M_MARGIN)
    logp = jax.nn.log_softmax(logits, axis=-1)
    return -jnp.mean(jnp.sum(one_hot * logp, axis=-1))


if __name__ == "__main__":
    key = jax.random.PRNGKey(0)

    # Config 1: batch padding (12 -> 16, split into 2 batch tiles) and class
    #           padding/mask (20 -> 24).
    # Config 2: multiple class tiles -> exercises the online-softmax
    #           accumulators across the reduction grid axis (grid_c = 3).
    # Config 3: multiple batch tiles AND multiple class tiles.
    configs = [
        dict(B=12, D=32, C=20, tb=128, tc=2048),
        dict(B=8, D=64, C=300, tb=128, tc=128),
        dict(B=64, D=128, C=512, tb=256, tc=256),
    ]

    for cfg in configs:
        B, D, C = cfg["B"], cfg["D"], cfg["C"]
        key, k_x, k_w, k_l = jax.random.split(key, 4)
        x = jax.random.normal(k_x, (B, D), dtype=jnp.float32)
        # kaiming_normal_(a=1, mode='fan_in', nonlinearity='leaky_relu'):
        #   gain = sqrt(2 / (1 + a^2)) = 1  ->  std = 1 / sqrt(fan_in)
        weight = jax.random.normal(k_w, (C, D), dtype=jnp.float32) * (1.0 / jnp.sqrt(D))
        label = jax.random.randint(k_l, (B,), 0, C, dtype=jnp.int32)

        ref = _reference(x, weight, label)

        # bf16 MXU path (default): ~1e-3-level loss error vs the f32 reference.
        loss_bf16 = normalized_softmax_loss(x, weight, label,
                                            tb=cfg["tb"], tc=cfg["tc"],
                                            use_bf16=True)
        jax.block_until_ready(loss_bf16)
        assert jnp.abs(loss_bf16 - ref) <= 2e-2 * jnp.abs(ref) + 1e-1, \
            (cfg, "bf16", loss_bf16, ref)

        # f32 path: bitwise-tight check of the kernel structure.
        loss_f32 = normalized_softmax_loss(x, weight, label,
                                           tb=cfg["tb"], tc=cfg["tc"],
                                           use_bf16=False)
        jax.block_until_ready(loss_f32)
        assert jnp.allclose(loss_f32, ref, rtol=1e-4, atol=1e-4), \
            (cfg, "f32", loss_f32, ref)

    print("KERNEL_OK")
</pallas_src>

<mosaic_0001>
module attributes {stable_mosaic.version = 11 : i64} {
  func.func @_nsl_kernel(%arg0: i32, %arg1: i32, %arg2: memref<8x32xf32, #tpu.memory_space<vmem>>, %arg3: memref<24x32xbf16, #tpu.memory_space<vmem>>, %arg4: memref<1x24xf32, #tpu.memory_space<vmem>>, %arg5: memref<8x1xi32, #tpu.memory_space<vmem>>, %arg6: memref<8x1xf32, #tpu.memory_space<vmem>>, %arg7: memref<8x32xbf16, #tpu.memory_space<vmem>>, %arg8: memref<8x1xf32, #tpu.memory_space<vmem>>, %arg9: memref<8x1xf32, #tpu.memory_space<vmem>>, %arg10: memref<8x1xf32, #tpu.memory_space<vmem>>) attributes {dimension_semantics = [#tpu.dimension_semantics<parallel>, #tpu.dimension_semantics<arbitrary>], iteration_bounds = array<i64: 2, 1>, scalar_prefetch = 0 : i64, scratch_operands = 4 : i64, tpu.core_type = #tpu.core_type<tc>, window_params = [{transform_indices = @transform_0, window_bounds = array<i64: 8, 32>}, {transform_indices = @transform_1, window_bounds = array<i64: 24, 32>}, {transform_indices = @transform_2, window_bounds = array<i64: 1, 24>}, {transform_indices = @transform_3, window_bounds = array<i64: 8, 1>}, {transform_indices = @transform_4, window_bounds = array<i64: 8, 1>}]} {
    %c0_i32 = arith.constant 0 : i32
    %0 = arith.cmpi eq, %arg1, %c0_i32 : i32
    %1 = arith.extui %0 : i1 to i32
    %c0_i32_0 = arith.constant 0 : i32
    %2 = arith.cmpi ne, %1, %c0_i32_0 : i32
    scf.if %2 {
      %c0_29 = arith.constant 0 : index
      %c0_30 = arith.constant 0 : index
      %50 = vector.load %arg2[%c0_29, %c0_30] : memref<8x32xf32, #tpu.memory_space<vmem>>, vector<8x32xf32>
      %51 = arith.mulf %50, %50 : vector<8x32xf32>
      %cst_31 = arith.constant dense<0.000000e+00> : vector<8xf32>
      %52 = vector.multi_reduction <add>, %51, %cst_31 [1] : vector<8x32xf32> to vector<8xf32>
      %53 = vector.shape_cast %52 : vector<8xf32> to vector<8x1xf32>
      %cst_32 = arith.constant 1.000000e-10 : f32
      %54 = vector.broadcast %cst_32 : f32 to vector<8x1xf32>
      %55 = arith.maximumf %53, %54 : vector<8x1xf32>
      %56 = math.rsqrt %55 : vector<8x1xf32>
      %57 = vector.broadcast %56 : vector<8x1xf32> to vector<8x32xf32>
      %58 = arith.mulf %50, %57 : vector<8x32xf32>
      %59 = arith.truncf %58 : vector<8x32xf32> to vector<8x32xbf16>
      %c0_33 = arith.constant 0 : index
      %c0_34 = arith.constant 0 : index
      %60 = vector.load %arg7[%c0_33, %c0_34] : memref<8x32xbf16, #tpu.memory_space<vmem>>, vector<8x32xbf16>
      tpu.vector_store %arg7[%c0_33, %c0_34], %59 {strides = array<i32>} : memref<8x32xbf16, #tpu.memory_space<vmem>>, vector<8x32xbf16>,
      %cst_35 = arith.constant -1.000000e+30 : f32
      %61 = vector.broadcast %cst_35 : f32 to vector<8x1xf32>
      %c0_36 = arith.constant 0 : index
      %c0_37 = arith.constant 0 : index
      %62 = vector.load %arg8[%c0_36, %c0_37] : memref<8x1xf32, #tpu.memory_space<vmem>>, vector<8x1xf32>
      tpu.vector_store %arg8[%c0_36, %c0_37], %61 {strides = array<i32>} : memref<8x1xf32, #tpu.memory_space<vmem>>, vector<8x1xf32>,
      %cst_38 = arith.constant 0.000000e+00 : f32
      %63 = vector.broadcast %cst_38 : f32 to vector<8x1xf32>
      %c0_39 = arith.constant 0 : index
      %c0_40 = arith.constant 0 : index
      %64 = vector.load %arg9[%c0_39, %c0_40] : memref<8x1xf32, #tpu.memory_space<vmem>>, vector<8x1xf32>
      tpu.vector_store %arg9[%c0_39, %c0_40], %63 {strides = array<i32>} : memref<8x1xf32, #tpu.memory_space<vmem>>, vector<8x1xf32>,
      %cst_41 = arith.constant 0.000000e+00 : f32
      %65 = vector.broadcast %cst_41 : f32 to vector<8x1xf32>
      %c0_42 = arith.constant 0 : index
      %c0_43 = arith.constant 0 : index
      %66 = vector.load %arg10[%c0_42, %c0_43] : memref<8x1xf32, #tpu.memory_space<vmem>>, vector<8x1xf32>
      tpu.vector_store %arg10[%c0_42, %c0_43], %65 {strides = array<i32>} : memref<8x1xf32, #tpu.memory_space<vmem>>, vector<8x1xf32>,
    } else {
    }
    %c0 = arith.constant 0 : index
    %c0_1 = arith.constant 0 : index
    %3 = vector.load %arg7[%c0, %c0_1] : memref<8x32xbf16, #tpu.memory_space<vmem>>, vector<8x32xbf16>
    %c0_2 = arith.constant 0 : index
    %c0_3 = arith.constant 0 : index
    %4 = vector.load %arg3[%c0_2, %c0_3] : memref<24x32xbf16, #tpu.memory_space<vmem>>, vector<24x32xbf16>
    %cst = arith.constant dense<0.000000e+00> : vector<8x24xf32>
    %5 = tpu.matmul %3, %4, %cst {dimension_numbers = #tpu.dot_dimension_numbers<[1], [1], [0], [0], [0, 0, 1, 0], [], []>} : vector<8x32xbf16>, vector<24x32xbf16>, vector<8x24xf32> -> vector<8x24xf32>
    %c0_4 = arith.constant 0 : index
    %c0_5 = arith.constant 0 : index
    %6 = vector.load %arg5[%c0_4, %c0_5] : memref<8x1xi32, #tpu.memory_space<vmem>>, vector<8x1xi32>
    %7 = tpu.iota {dimensions = array<i32: 1>} : vector<8x24xi32>
    %c24_i32 = arith.constant 24 : i32
    %8 = arith.muli %arg1, %c24_i32 : i32
    %9 = vector.broadcast %8 : i32 to vector<8x24xi32>
    %10 = arith.addi %7, %9 : vector<8x24xi32>
    %11 = vector.broadcast %6 : vector<8x1xi32> to vector<8x24xi32>
    %12 = arith.cmpi eq, %10, %11 : vector<8x24xi32>
    %c0_6 = arith.constant 0 : index
    %c0_7 = arith.constant 0 : index
    %13 = vector.load %arg4[%c0_6, %c0_7] : memref<1x24xf32, #tpu.memory_space<vmem>>, vector<1x24xf32>
    %14 = vector.broadcast %13 : vector<1x24xf32> to vector<8x24xf32>
    %15 = arith.mulf %5, %14 : vector<8x24xf32>
    %cst_8 = arith.constant 2.560000e+01 : f32
    %cst_9 = arith.constant 0.000000e+00 : f32
    %16 = vector.broadcast %cst_8 : f32 to vector<8x24xf32>
    %17 = vector.broadcast %cst_9 : f32 to vector<8x24xf32>
    %18 = arith.select %12, %16, %17 : vector<8x24xi1>, vector<8x24xf32>
    %19 = arith.subf %15, %18 : vector<8x24xf32>
    %c20_i32 = arith.constant 20 : i32
    %20 = vector.broadcast %c20_i32 : i32 to vector<8x24xi32>
    %21 = arith.cmpi slt, %10, %20 : vector<8x24xi32>
    %cst_10 = arith.constant -1.000000e+30 : f32
    %22 = vector.broadcast %cst_10 : f32 to vector<8x24xf32>
    %23 = arith.select %21, %19, %22 : vector<8x24xi1>, vector<8x24xf32>
    %c0_11 = arith.constant 0 : index
    %c0_12 = arith.constant 0 : index
    %24 = vector.load %arg8[%c0_11, %c0_12] : memref<8x1xf32, #tpu.memory_space<vmem>>, vector<8x1xf32>
    %cst_13 = arith.constant dense<0xFF800000> : vector<8xf32>
    %25 = vector.multi_reduction <maximumf>, %23, %cst_13 [1] : vector<8x24xf32> to vector<8xf32>
    %26 = vector.shape_cast %25 : vector<8xf32> to vector<8x1xf32>
    %27 = arith.maximumf %24, %26 : vector<8x1xf32>
    %28 = arith.subf %24, %27 : vector<8x1xf32>
    %29 = math.exp %28 : vector<8x1xf32>
    %c0_14 = arith.constant 0 : index
    %c0_15 = arith.constant 0 : index
    %30 = vector.load %arg9[%c0_14, %c0_15] : memref<8x1xf32, #tpu.memory_space<vmem>>, vector<8x1xf32>
    %31 = arith.mulf %29, %30 : vector<8x1xf32>
    %32 = vector.broadcast %27 : vector<8x1xf32> to vector<8x24xf32>
    %33 = arith.subf %23, %32 : vector<8x24xf32>
    %34 = math.exp %33 : vector<8x24xf32>
    %cst_16 = arith.constant dense<0.000000e+00> : vector<8xf32>
    %35 = vector.multi_reduction <add>, %34, %cst_16 [1] : vector<8x24xf32> to vector<8xf32>
    %36 = vector.shape_cast %35 : vector<8xf32> to vector<8x1xf32>
    %37 = arith.addf %31, %36 : vector<8x1xf32>
    %c0_17 = arith.constant 0 : index
    %c0_18 = arith.constant 0 : index
    %38 = vector.load %arg9[%c0_17, %c0_18] : memref<8x1xf32, #tpu.memory_space<vmem>>, vector<8x1xf32>
    tpu.vector_store %arg9[%c0_17, %c0_18], %37 {strides = array<i32>} : memref<8x1xf32, #tpu.memory_space<vmem>>, vector<8x1xf32>,
    %c0_19 = arith.constant 0 : index
    %c0_20 = arith.constant 0 : index
    %39 = vector.load %arg10[%c0_19, %c0_20] : memref<8x1xf32, #tpu.memory_space<vmem>>, vector<8x1xf32>
    %cst_21 = arith.constant 0.000000e+00 : f32
    %40 = vector.broadcast %cst_21 : f32 to vector<8x24xf32>
    %41 = arith.select %12, %23, %40 : vector<8x24xi1>, vector<8x24xf32>
    %cst_22 = arith.constant dense<0.000000e+00> : vector<8xf32>
    %42 = vector.multi_reduction <add>, %41, %cst_22 [1] : vector<8x24xf32> to vector<8xf32>
    %43 = vector.shape_cast %42 : vector<8xf32> to vector<8x1xf32>
    %44 = arith.addf %39, %43 : vector<8x1xf32>
    %c0_23 = arith.constant 0 : index
    %c0_24 = arith.constant 0 : index
    %45 = vector.load %arg10[%c0_23, %c0_24] : memref<8x1xf32, #tpu.memory_space<vmem>>, vector<8x1xf32>
    tpu.vector_store %arg10[%c0_23, %c0_24], %44 {strides = array<i32>} : memref<8x1xf32, #tpu.memory_space<vmem>>, vector<8x1xf32>,
    %c0_25 = arith.constant 0 : index
    %c0_26 = arith.constant 0 : index
    %46 = vector.load %arg8[%c0_25, %c0_26] : memref<8x1xf32, #tpu.memory_space<vmem>>, vector<8x1xf32>
    tpu.vector_store %arg8[%c0_25, %c0_26], %27 {strides = array<i32>} : memref<8x1xf32, #tpu.memory_space<vmem>>, vector<8x1xf32>,
    %c0_i32_27 = arith.constant 0 : i32
    %47 = arith.cmpi eq, %arg1, %c0_i32_27 : i32
    %48 = arith.extui %47 : i1 to i32
    %c0_i32_28 = arith.constant 0 : i32
    %49 = arith.cmpi ne, %48, %c0_i32_28 : i32
    scf.if %49 {
      %c0_29 = arith.constant 0 : index
      %c0_30 = arith.constant 0 : index
      %50 = vector.load %arg8[%c0_29, %c0_30] : memref<8x1xf32, #tpu.memory_space<vmem>>, vector<8x1xf32>
      %c0_31 = arith.constant 0 : index
      %c0_32 = arith.constant 0 : index
      %51 = vector.load %arg9[%c0_31, %c0_32] : memref<8x1xf32, #tpu.memory_space<vmem>>, vector<8x1xf32>
      %52 = math.log %51 : vector<8x1xf32>
      %53 = arith.addf %50, %52 : vector<8x1xf32>
      %c0_33 = arith.constant 0 : index
      %c0_34 = arith.constant 0 : index
      %54 = vector.load %arg10[%c0_33, %c0_34] : memref<8x1xf32, #tpu.memory_space<vmem>>, vector<8x1xf32>
      %55 = arith.subf %53, %54 : vector<8x1xf32>
      %c0_35 = arith.constant 0 : index
      %c0_36 = arith.constant 0 : index
      %56 = vector.load %arg6[%c0_35, %c0_36] : memref<8x1xf32, #tpu.memory_space<vmem>>, vector<8x1xf32>
      tpu.vector_store %arg6[%c0_35, %c0_36], %55 {strides = array<i32>} : memref<8x1xf32, #tpu.memory_space<vmem>>, vector<8x1xf32>,
    } else {
    }
    return
  }
  func.func @transform_0(%arg0: i32, %arg1: i32) -> (i32, i32) {
    %c0_i32 = arith.constant 0 : i32
    %c0_i32_0 = arith.constant 0 : i32
    return %arg0, %c0_i32 : i32, i32
  }
  func.func @transform_1(%arg0: i32, %arg1: i32) -> (i32, i32) {
    %c0_i32 = arith.constant 0 : i32
    %c0_i32_0 = arith.constant 0 : i32
    return %arg1, %c0_i32 : i32, i32
  }
  func.func @transform_2(%arg0: i32, %arg1: i32) -> (i32, i32) {
    %c0_i32 = arith.constant 0 : i32
    %c0_i32_0 = arith.constant 0 : i32
    return %c0_i32, %arg1 : i32, i32
  }
  func.func @transform_3(%arg0: i32, %arg1: i32) -> (i32, i32) {
    %c0_i32 = arith.constant 0 : i32
    %c0_i32_0 = arith.constant 0 : i32
    return %arg0, %c0_i32 : i32, i32
  }
  func.func @transform_4(%arg0: i32, %arg1: i32) -> (i32, i32) {
    %c0_i32 = arith.constant 0 : i32
    %c0_i32_0 = arith.constant 0 : i32
    return %arg0, %c0_i32 : i32, i32
  }
}

</mosaic_0001>

<llo_original>
// kernel: tpu_custom_call.1
$region0: #{tpu_custom_call.1}
  #allocation0 [shape = 'u32[]', space=smem, size = 0x4, offset = 0x4, fixed_abs, tag = 'smem constant byte address 0x4 - core index']
  #allocation1 [shape = 'u32[144,128]{1,0:T(1,128)}', space=vmem, size = 0x12000, scoped, tag = 'internal scratch']
  #allocation2 [shape = 'bf16[8,32]{1,0:T(8,128)(2,1)}', space=vmem, size = 0x800, scoped, tag = 'scratch operand']
  #allocation3 [shape = 'f32[8,1]{1,0:T(8,128)}', space=vmem, size = 0x1000, scoped, tag = 'scratch operand']
  #allocation4 [shape = 'f32[8,1]{1,0:T(8,128)}', space=vmem, size = 0x1000, scoped, tag = 'scratch operand']
  #allocation5 [shape = 'f32[8,1]{1,0:T(8,128)}', space=vmem, size = 0x1000, scoped, tag = 'scratch operand']
  %s0 = inlined_call_operand.vmem [shape: f32[16,32], index: 0, kind: input, shape index: {}]
  %s1 = inlined_call_operand.hbm [shape: bf16[24,32], index: 1, kind: input, shape index: {}]
  %s2 = inlined_call_operand.vmem [shape: f32[1,24], index: 2, kind: input, shape index: {}]
  %s3 = inlined_call_operand.vmem [shape: s32[16,1], index: 3, kind: input, shape index: {}]
  %s4 = inlined_call_operand.vmem [shape: f32[16,1], index: 4, kind: output, shape index: {}]
  %s5 = sld [smem:[#allocation0]]
  $region61: #{tpu_custom_call.1} parent=0
    _
  %s7 = ssub.s32 1, %s5
  %s8 = scalar_select 0, %s7, %s5
  $region1: #{tpu_custom_call.1} parent=0
    #allocation6 [shape = 'u8[6144]{0}', space=vmem, size = 0x1800, scoped, tag = 'input window, operand 1, single buffered']
    #allocation7 [shape = 's32[2]{0}', space=sflag, size = 0x8, scoped, tag = 'scoped memory for tpu_custom_call.1']
    %9 = vsyncpa [#allocation7], 0
    loop: start=0, step=1, limit=4
    $region2: #{tpu_custom_call.1} parent=1 // loop_pre_header
      _
    $region3: #{tpu_custom_call.1} parent=1 // loop_header
      %s11 = sphi 0, %s15
      %p12 = scmp.ge.s32.totalorder %s11, 4
      %s18 = sphi 0, %s30
      %s19 = sphi 0, %s26
      %s20 = sphi 0, %s18
      %s21 = sphi 0, %s19
      %s22 = sphi 0, %s20
      %s23 = sphi 0, %s21
      %s33 = sphi 0, %s35
      %s36 = sphi 0, %s33
      %s37 = sphi 0, %s36
      %s53 = sphi 0, %s37
      %s59 = sphi 0, %s61
      %s62 = sphi 0, %s59
      %s63 = sphi 0, %s62
      %s79 = sphi 0, %s63
      %s85 = sphi 0, %s87
      %s88 = sphi 0, %s85
      %s89 = sphi 0, %s88
      %s105 = sphi 0, %s89
      %s111 = sphi 0, %s113
      %s114 = sphi 0, %s111
      %s115 = sphi 0, %s114
      %s131 = sphi 0, %s115
      %s137 = sphi 0, %s139
      %s140 = sphi 0, %s137
      %s141 = sphi 0, %s140
      %s157 = sphi 0, %s141
    $region4: #{tpu_custom_call.1} parent=1 // loop_header_branch
      %14 = sbr.rel (%p12) target = $region8
    $region5: #{tpu_custom_call.1} parent=1 // loop_body
      %s16 = ssub.s32 %s11, 1
      %s17 = ssub.s32 %s11, 2
      %s24 = sadd.s32 1, %s19
      %p25 = scmp.ge.s32.totalorder %s24, 1
      %s26 = scalar_select %p25, 0, %s24
      %s27 = sadd.s32 1, %s18
      %s28 = scalar_select %p25, %s27, %s18
      %p29 = scmp.ge.s32.totalorder %s28, 2
      %s30 = scalar_select %p29, 0, %s28
      %s31 = ssub.s32 %s18, %s30
      %p32 = scmp.eq.s32.totalorder %s31, 0
      %s34 = sadd.s32 %s33, 1
      %s35 = scalar_select %p32, %s33, %s34
      %p38 = pneg %p32
      %p39 = scmp.eq.s32.totalorder %s11, 1
      %p40 = por %p38, %p39
      %p41 = scmp.ne.s32.totalorder %s33, %s36
      %p42 = scmp.eq.s32.totalorder %s11, 0
      %p43 = por %p41, %p42
      %p44 = scmp.ne.s32.totalorder %s33, %s36
      %p45 = scmp.eq.s32.totalorder %s16, 1
      %p46 = por %p44, %p45
      %p47 = scmp.ne.s32.totalorder %s36, %s37
      %p48 = scmp.eq.s32.totalorder %s16, 0
      %p49 = por %p47, %p48
      %p50 = scmp.ne.s32.totalorder %s36, %s37
      %p51 = scmp.eq.s32.totalorder %s17, 1
      %p52 = por %p50, %p51
      %p54 = scmp.ne.s32.totalorder %s37, %s53
      %p55 = scmp.eq.s32.totalorder %s17, 0
      %p56 = por %p54, %p55
      %s57 = ssub.s32 %s19, %s26
      %p58 = scmp.eq.s32.totalorder %s57, 0
      %s60 = sadd.s32 %s59, 1
      %s61 = scalar_select %p58, %s59, %s60
      %p64 = pneg %p58
      %p65 = scmp.eq.s32.totalorder %s11, 1
      %p66 = por %p64, %p65
      %p67 = scmp.ne.s32.totalorder %s59, %s62
      %p68 = scmp.eq.s32.totalorder %s11, 0
      %p69 = por %p67, %p68
      %p70 = scmp.ne.s32.totalorder %s59, %s62
      %p71 = scmp.eq.s32.totalorder %s16, 1
      %p72 = por %p70, %p71
      %p73 = scmp.ne.s32.totalorder %s62, %s63
      %p74 = scmp.eq.s32.totalorder %s16, 0
      %p75 = por %p73, %p74
      %p76 = scmp.ne.s32.totalorder %s62, %s63
      %p77 = scmp.eq.s32.totalorder %s17, 1
      %p78 = por %p76, %p77
      %p80 = scmp.ne.s32.totalorder %s63, %s79
      %p81 = scmp.eq.s32.totalorder %s17, 0
      %p82 = por %p80, %p81
      %s83 = ssub.s32 %s19, %s26
      %p84 = scmp.eq.s32.totalorder %s83, 0
      %s86 = sadd.s32 %s85, 1
      %s87 = scalar_select %p84, %s85, %s86
      %p90 = pneg %p84
      %p91 = scmp.eq.s32.totalorder %s11, 1
      %p92 = por %p90, %p91
      %p93 = scmp.ne.s32.totalorder %s85, %s88
      %p94 = scmp.eq.s32.totalorder %s11, 0
      %p95 = por %p93, %p94
      %p96 = scmp.ne.s32.totalorder %s85, %s88
      %p97 = scmp.eq.s32.totalorder %s16, 1
      %p98 = por %p96, %p97
      %p99 = scmp.ne.s32.totalorder %s88, %s89
      %p100 = scmp.eq.s32.totalorder %s16, 0
      %p101 = por %p99, %p100
      %p102 = scmp.ne.s32.totalorder %s88, %s89
      %p103 = scmp.eq.s32.totalorder %s17, 1
      %p104 = por %p102, %p103
      %p106 = scmp.ne.s32.totalorder %s89, %s105
      %p107 = scmp.eq.s32.totalorder %s17, 0
      %p108 = por %p106, %p107
      %s109 = ssub.s32 %s18, %s30
      %p110 = scmp.eq.s32.totalorder %s109, 0
      %s112 = sadd.s32 %s111, 1
      %s113 = scalar_select %p110, %s111, %s112
      %p116 = pneg %p110
      %p117 = scmp.eq.s32.totalorder %s11, 1
      %p118 = por %p116, %p117
      %p119 = scmp.ne.s32.totalorder %s111, %s114
      %p120 = scmp.eq.s32.totalorder %s11, 0
      %p121 = por %p119, %p120
      %p122 = scmp.ne.s32.totalorder %s111, %s114
      %p123 = scmp.eq.s32.totalorder %s16, 1
      %p124 = por %p122, %p123
      %p125 = scmp.ne.s32.totalorder %s114, %s115
      %p126 = scmp.eq.s32.totalorder %s16, 0
      %p127 = por %p125, %p126
      %p128 = scmp.ne.s32.totalorder %s114, %s115
      %p129 = scmp.eq.s32.totalorder %s17, 1
      %p130 = por %p128, %p129
      %p132 = scmp.ne.s32.totalorder %s115, %s131
      %p133 = scmp.eq.s32.totalorder %s17, 0
      %p134 = por %p132, %p133
      %s135 = ssub.s32 %s18, %s30
      %p136 = scmp.eq.s32.totalorder %s135, 0
      %s138 = sadd.s32 %s137, 1
      %s139 = scalar_select %p136, %s137, %s138
      %p142 = pneg %p136
      %p143 = scmp.eq.s32.totalorder %s11, 1
      %p144 = por %p142, %p143
      %p145 = scmp.ne.s32.totalorder %s137, %s140
      %p146 = scmp.eq.s32.totalorder %s11, 0
      %p147 = por %p145, %p146
      %p148 = scmp.ne.s32.totalorder %s137, %s140
      %p149 = scmp.eq.s32.totalorder %s16, 1
      %p150 = por %p148, %p149
      %p151 = scmp.ne.s32.totalorder %s140, %s141
      %p152 = scmp.eq.s32.totalorder %s16, 0
      %p153 = por %p151, %p152
      %p154 = scmp.ne.s32.totalorder %s140, %s141
      %p155 = scmp.eq.s32.totalorder %s17, 1
      %p156 = por %p154, %p155
      %p158 = scmp.ne.s32.totalorder %s141, %s157
      %p159 = scmp.eq.s32.totalorder %s17, 0
      %p160 = por %p158, %p159
      %p161 = scmp.le.s32.totalorder 1, %s11
      %p162 = scmp.lt.s32.totalorder %s11, 3
      %p163 = pnand %p161, %p162
      %p164 = pneg %p163
      // Predicated region
      $region9: #{tpu_custom_call.1} parent=5 // pred_check
        _
      $region10: #{tpu_custom_call.1} parent=5 // pred_check_branch
        %166 = sbr.rel (%p163) target = $region12
      $region11: #{tpu_custom_call.1} parent=5 // pred_region
        %s167 = ssub.s32 %s11, 1
        // Predicated region
        $region13: #{tpu_custom_call.1} parent=11 // pred_check
          %p168 = pneg %p75
        $region14: #{tpu_custom_call.1} parent=11 // pred_check_branch
          %170 = sbr.rel (%p168) target = $region16
        $region15: #{tpu_custom_call.1} parent=11 // pred_region
          %s171 = smul.u32 3, %s21
          %s173 = ssub.s32 192, 192
          %174 = vsyncadd [#allocation7], %s173
          %s175 = smul.addr %s171, 64
          %s176 = scalar_lea.hbm %s1, %s175
          %s177 = sshll.u32 [#allocation6], 4
          %s178 = int_to_ptr.vmem [resolvable:$true] %s177
          %183 = dma.hbm_to_vmem [thread:$0]  %s176, 192, %s178, [#allocation7], 64, 64, 4
        $region16: #{tpu_custom_call.1} parent=11 // pred_fallthru
          _
        // Predicated region
        $region17: #{tpu_custom_call.1} parent=11 // pred_check
          %p184 = pneg %p101
        $region18: #{tpu_custom_call.1} parent=11 // pred_check_branch
          %186 = sbr.rel (%p184) target = $region20
        $region19: #{tpu_custom_call.1} parent=11 // pred_region
          %p187 = scmp.lt.s32.totalorder %s21, 0
          %s188 = scalar_select %p187, %s21, 0
          %s189 = scalar_lea.vmem %s2, %s188
        $region20: #{tpu_custom_call.1} parent=11 // pred_fallthru
          _
      $region12: #{tpu_custom_call.1} parent=5 // pred_fallthru
        _
      %p190 = scmp.lt.s32.totalorder %s11, 2
      // Predicated region
      $region21: #{tpu_custom_call.1} parent=5 // pred_check
        %p191 = pneg %p190
      $region22: #{tpu_custom_call.1} parent=5 // pred_check_branch
        %193 = sbr.rel (%p191) target = $region24
      $region23: #{tpu_custom_call.1} parent=5 // pred_region
        // Predicated region
        $region25: #{tpu_custom_call.1} parent=23 // pred_check
          %p194 = pneg %p43
        $region26: #{tpu_custom_call.1} parent=23 // pred_check_branch
          %196 = sbr.rel (%p194) target = $region28
        $region27: #{tpu_custom_call.1} parent=23 // pred_region
          %p197 = scmp.lt.s32.totalorder %s18, 1
          %s198 = scalar_select %p197, %s18, 1
          %s199 = smul.addr %s198, 8
          %s200 = scalar_lea.vmem %s0, %s199
        $region28: #{tpu_custom_call.1} parent=23 // pred_fallthru
          _
        // Predicated region
        $region29: #{tpu_custom_call.1} parent=23 // pred_check
          %p201 = pneg %p121
        $region30: #{tpu_custom_call.1} parent=23 // pred_check_branch
          %203 = sbr.rel (%p201) target = $region32
        $region31: #{tpu_custom_call.1} parent=23 // pred_region
          %p204 = scmp.lt.s32.totalorder %s18, 1
          %s205 = scalar_select %p204, %s18, 1
          %s206 = smul.addr %s205, 8
          %s207 = scalar_lea.vmem %s3, %s206
        $region32: #{tpu_custom_call.1} parent=23 // pred_fallthru
          _
      $region24: #{tpu_custom_call.1} parent=5 // pred_fallthru
        _
      %p208 = scmp.le.s32.totalorder 1, %s11
      %p209 = scmp.lt.s32.totalorder %s11, 3
      %p210 = pnand %p208, %p209
      %p211 = pneg %p210
      // Predicated region
      $region33: #{tpu_custom_call.1} parent=5 // pred_check
        _
      $region34: #{tpu_custom_call.1} parent=5 // pred_check_branch
        %213 = sbr.rel (%p210) target = $region36
      $region35: #{tpu_custom_call.1} parent=5 // pred_region
        %s214 = ssub.s32 %s11, 1
        // Predicated region
        $region37: #{tpu_custom_call.1} parent=35 // pred_check
          %p215 = pneg %p75
        $region38: #{tpu_custom_call.1} parent=35 // pred_check_branch
          %217 = sbr.rel (%p215) target = $region40
        $region39: #{tpu_custom_call.1} parent=35 // pred_region
          %218 = dma.done [#allocation7], 192
        $region40: #{tpu_custom_call.1} parent=35 // pred_fallthru
          _
        %p219 = scmp.lt.s32.totalorder %s20, 1
        %s220 = scalar_select %p219, %s20, 1
        %s221 = smul.addr %s220, 8
        %s222 = scalar_lea.vmem %s0, %s221
        %p223 = pneg %p49
        %p224 = pneg %p46
        %p225 = pneg %p75
        %p226 = pneg %p72
        %p227 = scmp.lt.s32.totalorder %s21, 0
        %s228 = scalar_select %p227, %s21, 0
        %s229 = scalar_lea.vmem %s2, %s228
        %p230 = pneg %p101
        %p231 = pneg %p98
        %p232 = scmp.lt.s32.totalorder %s20, 1
        %s233 = scalar_select %p232, %s20, 1
        %s234 = smul.addr %s233, 8
        %s235 = scalar_lea.vmem %s3, %s234
        %p236 = pneg %p127
        %p237 = pneg %p124
        %p238 = pneg %p153
        %p239 = pneg %p150
        %p240 = scmp.lt.s32.totalorder %s20, 1
        %s241 = scalar_select %p240, %s20, 1
        %s242 = smul.addr %s241, 8
        %s243 = scalar_lea.vmem %s4, %s242
        %p244 = scmp.lt.s32.totalorder %s20, 1
        %s245 = scalar_select %p244, %s20, 1
        %s246 = smul.addr %s245, 8
        %s247 = scalar_lea.vmem %s0, %s246
        %s248 = smul.u32 3, %s21
        %p249 = scmp.lt.s32.totalorder %s21, 0
        %s250 = scalar_select %p249, %s21, 0
        %s251 = scalar_lea.vmem %s2, %s250
        %p252 = scmp.lt.s32.totalorder %s20, 1
        %s253 = scalar_select %p252, %s20, 1
        %s254 = smul.addr %s253, 8
        %s255 = scalar_lea.vmem %s3, %s254
        %p256 = scmp.lt.s32.totalorder %s20, 1
        %s257 = scalar_select %p256, %s20, 1
        %s258 = smul.addr %s257, 8
        %s259 = scalar_lea.vmem %s4, %s258
        %p261 = scmp.eq.s32.totalorder %s21, 0
        // Predicated region
        $region41: #{tpu_custom_call.1} parent=35 // pred_check
          %p262 = pneg %p261
        $region42: #{tpu_custom_call.1} parent=35 // pred_check_branch
          %264 = sbr.rel (%p262) target = $region44
        $region43: #{tpu_custom_call.1} parent=35 // pred_region
          %v265 = vld [vmem:[%s247] sm:$0xff]
          %v266 = vmul.f32 %v265, %v265
          %vm267 = vcmask 261120
          %v268 = vsel %vm267, %v266, 0.0
          %269 = vadd.xlane.f32.xlu0 %v268
          %v270 = vpop.xlane.xlu0 %269
          %v271 = vmax.f32 %v270, 1e-10
          %v272 = vrsqrt.pop %v271
          %v273 = vmul.f32 %v265, %v272
          %v274 = vpack.c.bf16 %v273, %v273
          %vm275 = vcmask 257024
          %276 = vst.msk [vmem:[#allocation2] sm:$0xf] %vm275, %v274
          %vm277 = vcmask 7168
          %278 = vst.msk [vmem:[#allocation3] sm:$0xff] %vm277, -1e+30
          %279 = vst.msk [vmem:[#allocation4] sm:$0xff] %vm277, 0.0
          %280 = vst.msk [vmem:[#allocation5] sm:$0xff] %vm277, 0.0
        $region44: #{tpu_custom_call.1} parent=35 // pred_fallthru
          _
        %v281 = vld [vmem:[#allocation2] sm:$0xf]
        %v282 = vld [vmem:[#allocation6] sm:$0xf]
        %v283 = vld [vmem:[#allocation6 + $0x4] sm:$0xf]
        %v284 = vld [vmem:[#allocation6 + $0x8] sm:$0xf]
        %v288 = vunpack.c.l.b16 %v282
        %v289 = vunpack.c.l.b16 %v283
        %v290 = vunpack.c.l.b16 %v284
        %v291 = vpack.c.b16 %v289, %v288
        %v292 = vpack.c.b16 %v290, %v290
        %vm293 = vcmask 261120
        %v295 = vsel %vm293, %v281, 0
        %v298 = vsel %vm293, %v291, 0
        %v301 = vsel %vm293, %v292, 0
        %303 = vmatprep.subr.bf16.mxu0 0
        %304 = vmatpush1.bf16.xpose.msra.mxu0 %v298
        %305 = vmatprep.subr.bf16.mxu0 0
        %306 = vmatpush1.bf16.xpose.msra.mxu0 %v301
        %307 = vmatprep.subr.bf16.mxu0 0
        %308 = vmatpush1.bf16.xpose.msra.mxu0 0
        %309 = vmatprep.subr.bf16.mxu0 0
        %310 = vmatpush1.bf16.xpose.msra.mxu0 0
        %311 = vmatprep.subr.bf16.mxu0 0
        %312 = vmatpush1.bf16.xpose.msra.mxu0 0
        %313 = vmatprep.subr.bf16.mxu0 0
        %314 = vmatpush1.bf16.xpose.msra.mxu0 0
        %315 = vmatprep.subr.bf16.mxu0 0
        %316 = vmatpush1.bf16.xpose.msra.mxu0 0
        %317 = vmatprep.subr.bf16.mxu0 0
        %318 = vmatpush1.bf16.xpose.msra.mxu0 0
        %319 = vmatprep.subr.bf16.mxu0 0
        %320 = vmatpush1.bf16.xpose.msra.mxu0 0
        %321 = vmatprep.subr.bf16.mxu0 0
        %322 = vmatpush1.bf16.xpose.msra.mxu0 0
        %323 = vmatprep.subr.bf16.mxu0 0
        %324 = vmatpush1.bf16.xpose.msra.mxu0 0
        %325 = vmatprep.subr.bf16.mxu0 0
        %326 = vmatpush1.bf16.xpose.msra.mxu0 0
        %327 = vmatprep.subr.bf16.mxu0 0
        %328 = vmatpush1.bf16.xpose.msra.mxu0 0
        %329 = vmatprep.subr.bf16.mxu0 0
        %330 = vmatpush1.bf16.xpose.msra.mxu0 0
        %331 = vmatprep.subr.bf16.mxu0 0
        %332 = vmatpush1.bf16.xpose.msra.mxu0 0
        %333 = vmatprep.subr.bf16.mxu0 0
        %334 = vmatpush1.bf16.xpose.msra.mxu0 0
        %335 = vmatprep.mubr.bf16.mxu0 0
        %336 = vmatmul.mubr.bf16.gmra.mrb[0].mxu0 %v295
        %v337 = vpop.f32.mrb[0].mxu0
        %v338 = vadd.f32 0.0, %v337
        %v339 = vpop.f32.mrb[0].mxu0
        %v340 = vpop.f32.mrb[0].mxu0
        %v341 = vpop.f32.mrb[0].mxu0
        %342 = vdwg.mxu0
        %v343 = vld [vmem:[%s255] sm:$0xff]
        %v344 = vlaneseq
        %v345 = vand.u32 %v344, 127
        %s346 = smul.u32 %s21, 24
        %v347 = vstv %s346
        %v348 = vadd.s32 %v345, %v347
        %349 = vset.pattern.permute.xlu0 0
        %350 = vperm.xlu0 %349, %v343
        %v351 = vpop.permute.xlu0 %350
        %vm352 = vcmp.eq.s32.totalorder %v348, %v351
        %v353 = vld [vmem:[%s251] sm:$0x1]
        %v355 = vlaneseq
        %v356 = vshrl.u32 %v355, 7
        %v357 = vsub.s32 0, %v356
        %v358 = vrot.slane %v353, %v357
        %v360 = vmul.f32 %v338, %v358
        %v361 = vsel %vm352, 25.6, 0.0
        %v362 = vsub.f32 %v360, %v361
        %vm363 = vcmp.lt.s32.totalorder %v348, 20
        %v364 = vsel %vm363, %v362, -1e+30
        %v365 = vld [vmem:[#allocation3] sm:$0xff]
        %vm366 = vcmask 195584
        %v367 = vsel %vm366, %v364, -inf
        %368 = vmax.xlane.f32.xlu0 %v367
        %v369 = vpop.xlane.xlu0 %368
        %v370 = vmax.f32 %v365, %v369
        %v371 = vsub.f32 %v365, %v370
        %v372 = vmul.f32 %v371, 1.442695
        %v373 = vpow.pop %v372
        %v374 = vld [vmem:[#allocation4] sm:$0xff]
        %v375 = vmul.f32 %v373, %v374
        %377 = vset.pattern.permute.xlu0 0
        %378 = vperm.xlu0 %377, %v370
        %v379 = vpop.permute.xlu0 %378
        %v381 = vsub.f32 %v364, %v379
        %v382 = vmul.f32 %v381, 1.442695
        %v383 = vpow.pop %v382
        %v384 = vsel %vm366, %v383, 0.0
        %385 = vadd.xlane.f32.xlu0 %v384
        %v386 = vpop.xlane.xlu0 %385
        %v387 = vadd.f32 %v375, %v386
        %vm388 = vcmask 7168
        %389 = vst.msk [vmem:[#allocation4] sm:$0xff] %vm388, %v387
        %v390 = vld [vmem:[#allocation5] sm:$0xff]
        %v391 = vsel %vm352, %v364, 0.0
        %v392 = vsel %vm366, %v391, 0.0
        %393 = vadd.xlane.f32.xlu0 %v392
        %v394 = vpop.xlane.xlu0 %393
        %v395 = vadd.f32 %v390, %v394
        %396 = vst.msk [vmem:[#allocation5] sm:$0xff] %vm388, %v395
        %397 = vst.msk [vmem:[#allocation3] sm:$0xff] %vm388, %v370
        // Predicated region
        $region45: #{tpu_custom_call.1} parent=35 // pred_check
          %p398 = pneg %p261
        $region46: #{tpu_custom_call.1} parent=35 // pred_check_branch
          %400 = sbr.rel (%p398) target = $region48
        $region47: #{tpu_custom_call.1} parent=35 // pred_region
          %v401 = vld [vmem:[#allocation3] sm:$0xff]
          %v402 = vld [vmem:[#allocation4] sm:$0xff]
          %v403 = vlog2.pop %v402
          %v404 = vmul.f32 %v403, 0.6931472
          %v405 = vadd.f32 %v401, %v404
          %v406 = vld [vmem:[#allocation5] sm:$0xff]
          %v407 = vsub.f32 %v405, %v406
          %408 = vst.msk [vmem:[%s259] sm:$0xff] %vm388, %v407
        $region48: #{tpu_custom_call.1} parent=35 // pred_fallthru
          _
        %p409 = scmp.lt.s32.totalorder %s20, 1
        %s410 = scalar_select %p409, %s20, 1
        %s411 = smul.addr %s410, 8
        %s412 = scalar_lea.vmem %s4, %s411
        // Predicated region
        $region49: #{tpu_custom_call.1} parent=35 // pred_check
          %p413 = pneg %p150
        $region50: #{tpu_custom_call.1} parent=35 // pred_check_branch
          %415 = sbr.rel (%p413) target = $region52
        $region51: #{tpu_custom_call.1} parent=35 // pred_region
          _
        $region52: #{tpu_custom_call.1} parent=35 // pred_fallthru
          _
      $region36: #{tpu_custom_call.1} parent=5 // pred_fallthru
        _
      %p416 = scmp.le.s32.totalorder 2, %s11
      // Predicated region
      $region53: #{tpu_custom_call.1} parent=5 // pred_check
        %p417 = pneg %p416
      $region54: #{tpu_custom_call.1} parent=5 // pred_check_branch
        %419 = sbr.rel (%p417) target = $region56
      $region55: #{tpu_custom_call.1} parent=5 // pred_region
        %s420 = ssub.s32 %s11, 2
        // Predicated region
        $region57: #{tpu_custom_call.1} parent=55 // pred_check
          %p421 = pneg %p156
        $region58: #{tpu_custom_call.1} parent=55 // pred_check_branch
          %423 = sbr.rel (%p421) target = $region60
        $region59: #{tpu_custom_call.1} parent=55 // pred_region
          %p424 = scmp.lt.s32.totalorder %s22, 1
          %s425 = scalar_select %p424, %s22, 1
          %s426 = smul.addr %s425, 8
          %s427 = scalar_lea.vmem %s4, %s426
        $region60: #{tpu_custom_call.1} parent=55 // pred_fallthru
          _
      $region56: #{tpu_custom_call.1} parent=5 // pred_fallthru
        _
    $region6: #{tpu_custom_call.1} parent=1 // loop_footer
      %s15 = sadd.s32 1, %s11
    $region7: #{tpu_custom_call.1} parent=1 // loop_footer_branch
      %10 = sbr.rel target = $region3
    $region8: #{tpu_custom_call.1} parent=1 // loop_exit
      _
    %428 = vsyncpa [#allocation7], 1
    %s429 = scalar_lea.sflag [#allocation7], 1
    %430 = vsyncpa %s429, 1

</llo_original>
